<compile_context>
chip_gen: v7x
topology: tpu7x:2x2x1
jax: 0.10.0
libtpu: 0.0.40
codegen_flags: <defaults>
</compile_context>

<pallas_src>
import functools

import jax
import jax.numpy as jnp
from jax.experimental import pallas as pl
from jax.experimental.pallas import tpu as pltpu


# ---------------------------------------------------------------------------
# Kernels
# ---------------------------------------------------------------------------

def _conv_taps_kernel(w_ref, x_ref, h_ref, o_ref, win_ref, *,
                      kernel_size, dilation, padding, lead, residual, c_out):
    """Slab-free path (K accumulating matmuls).

    w_ref  : (K, C_out, C_in_p)     per-tap weights
    x_ref  : (C_in_p, T_t)          current tile = window cols [P, P+T_t)
    h_ref  : (1, C_in_p, P)         left context = window cols [0, P)
    o_ref  : (C_out, T_t)
    win_ref: (C_in_p, lead + T_t)   x stored at lane-aligned offset `lead`,
                                    halo at [lead-P, lead).
    """
    t_tile = x_ref.shape[-1]
    xv = x_ref[...]
    win_ref[:, lead:] = xv                       # full-width, lane-aligned store
    win_ref[:, lead - padding:lead] = h_ref[0]   # tiny halo store
    # Last tap (offset = P) is exactly the x tile -> use the resident value.
    acc = jnp.dot(w_ref[kernel_size - 1], xv, preferred_element_type=jnp.float32)
    for k in range(kernel_size - 1):
        s = lead - padding + k * dilation        # static offset
        acc = acc + jnp.dot(w_ref[k], win_ref[:, s:s + t_tile],
                            preferred_element_type=jnp.float32)
    if residual:
        acc = acc + xv[:c_out].astype(jnp.float32)
    o_ref[...] = jnp.where(acc >= 0, acc, 0.2 * acc).astype(o_ref.dtype)


def _conv_fold_kernel(w_ref, x_ref, h_ref, o_ref, win_ref, slab_ref, *,
                      kernel_size, dilation, padding, lead, residual, c_out):
    """Folded-tap path for shallow C_in (single MXU matmul, contraction K*C_in).

    w_ref   : (C_out, K*C_in_p)
    slab_ref: (K*C_in_p, T_t)  im2col slab, built with *aligned* stores
              (the misaligned part is now a load from the window scratch).
    """
    t_tile = x_ref.shape[-1]
    c_in_p = x_ref.shape[0]
    xv = x_ref[...]
    win_ref[:, lead:] = xv
    win_ref[:, lead - padding:lead] = h_ref[0]
    for k in range(kernel_size):
        s = lead - padding + k * dilation
        slab_ref[k * c_in_p:(k + 1) * c_in_p, :] = win_ref[:, s:s + t_tile]
    acc = jnp.dot(w_ref[...], slab_ref[...], preferred_element_type=jnp.float32)
    if residual:
        acc = acc + xv[:c_out].astype(jnp.float32)
    o_ref[...] = jnp.where(acc >= 0, acc, 0.2 * acc).astype(o_ref.dtype)


def _pointwise_kernel(w_ref, x_ref, o_ref, *, residual, c_out):
    """kernel_size == 1 (padding == 0): 1x1 conv + residual + leaky_relu."""
    xv = x_ref[...]
    acc = jnp.dot(w_ref[...], xv, preferred_element_type=jnp.float32)
    if residual:
        acc = acc + xv[:c_out].astype(jnp.float32)
    o_ref[...] = jnp.where(acc >= 0, acc, 0.2 * acc).astype(o_ref.dtype)


# ---------------------------------------------------------------------------
# Tiling / VMEM heuristics
# ---------------------------------------------------------------------------

def _vmem_limit_bytes():
    """Generation-aware scoped-VMEM limit (~5/8 of physical, capped)."""
    phys = None
    try:
        phys = getattr(pltpu.get_tpu_info(), "vmem_capacity_bytes", None)
    except Exception:
        phys = None
    if not phys:
        phys = 64 * 1024 * 1024          # conservative: v7x per-TC physical VMEM
    return int(min(phys * 5 // 8, 100 * 1024 * 1024))


def _block_vmem_bytes(t_tile, c_in_p, c_out, ks, padding, lead, isz, osz, fold):
    """Per-grid-step working set, including 2x pipelining and scratch."""
    n = 2 * c_in_p * t_tile * isz                   # x block (double-buffered)
    n += 2 * c_out * t_tile * osz                   # out block
    n += 2 * ks * c_in_p * c_out * isz              # weight (constant index map)
    if padding:
        n += 2 * c_in_p * padding * isz             # halo block
        n += c_in_p * (lead + t_tile) * isz         # window scratch
        if fold:
            n += ks * c_in_p * t_tile * isz         # folded im2col slab
    return n


def _pick_time_tile(seq_len, c_in_p, c_out, ks, padding, lead, isz, osz,
                    vmem_limit, fold):
    if seq_len % 128 != 0:
        # TODO(synk): ragged time tiling for huge non-multiple-of-128 sequences.
        return seq_len
    budget = int(vmem_limit * 0.6)       # headroom for Mosaic internal scratch
    admissible = [c for c in (8192, 4096, 2048, 1024, 512, 256, 128)
                  if seq_len % c == 0 and (c >= padding or c == seq_len)]
    for cand in admissible:              # biggest lane-dense tile that fits
        if _block_vmem_bytes(cand, c_in_p, c_out, ks, padding, lead,
                             isz, osz, fold) <= budget:
            return cand
    # TODO(synk): add a C_out grid axis for huge C_out instead of this fallback.
    return admissible[-1] if admissible else seq_len


# ---------------------------------------------------------------------------
# Wrapper
# ---------------------------------------------------------------------------

def causal_conv(x, weight, *, kernel_size, dilation, compute_dtype=None,
                time_tile=None, fold_taps=None):
    """Forward of CausalConv.  x: (B, C_in, T) (or (B, C_in*T)), weight: (C_out, C_in, K)."""
    c_out, c_in, k_w = weight.shape
    assert k_w == kernel_size
    batch = x.shape[0]
    x = x.reshape(batch, c_in, -1)                 # mirrors x.view(B, C_in, -1)
    seq_len = x.shape[-1]

    padding = dilation * (kernel_size - 1)
    residual = (c_out == c_in)
    out_dtype = x.dtype
    cdt = jnp.dtype(compute_dtype) if compute_dtype is not None else jnp.dtype(x.dtype)
    isz = cdt.itemsize
    osz = jnp.dtype(out_dtype).itemsize

    # Pad the contraction (channel) dim to the sublane packing so tap
    # row-blocks never land mid-vreg (zero channels / zero weight columns).
    c_align = max(8, 32 // isz)                    # 8 rows f32, 16 bf16, 32 int8
    c_in_p = c_in if c_in % c_align == 0 else ((c_in // c_align) + 1) * c_align
    x_c = x.astype(cdt)
    w_c = weight.astype(cdt)
    if c_in_p != c_in:
        x_c = jnp.pad(x_c, ((0, 0), (0, c_in_p - c_in), (0, 0)))
        w_c = jnp.pad(w_c, ((0, 0), (0, c_in_p - c_in), (0, 0)))

    if fold_taps is None:
        # Fold the K taps into one matmul only when C_in is MXU-shallow;
        # otherwise K accumulating matmuls avoid the slab entirely.
        fold_taps = (kernel_size > 1) and (c_in_p < 128)

    # x lands in the window scratch at a 128-lane-aligned offset.
    lead = 0 if padding == 0 else ((padding + 127) // 128) * 128

    vmem_limit = _vmem_limit_bytes()
    t_tile = (int(time_tile) if time_tile is not None
              else _pick_time_tile(seq_len, c_in_p, c_out, kernel_size, padding,
                                   lead, isz, osz, vmem_limit, fold_taps))
    assert seq_len % t_tile == 0, "time_tile must divide the sequence length"
    n_t = seq_len // t_tile

    grid = (batch, n_t)                            # one (C, T_t) tile per step
    x_spec = pl.BlockSpec((None, c_in_p, t_tile), lambda b, t: (b, 0, t))
    o_spec = pl.BlockSpec((None, c_out, t_tile), lambda b, t: (b, 0, t))
    out_shape = jax.ShapeDtypeStruct((batch, c_out, seq_len), out_dtype)
    compiler_params = pltpu.CompilerParams(
        dimension_semantics=("parallel", "parallel"),
        vmem_limit_bytes=vmem_limit)

    if padding == 0:                               # kernel_size == 1
        w2 = w_c[:, :, 0]                          # (C_out, C_in_p)
        w_spec = pl.BlockSpec((c_out, c_in_p), lambda b, t: (0, 0))
        kernel = functools.partial(_pointwise_kernel, residual=residual,
                                   c_out=c_out)
        return pl.pallas_call(
            kernel, out_shape=out_shape,
            grid_spec=pltpu.PrefetchScalarGridSpec(
                num_scalar_prefetch=0, grid=grid,
                in_specs=[w_spec, x_spec], out_specs=o_spec),
            compiler_params=compiler_params)(w2, x_c)

    # Left context ("halo") per time tile: the last P samples of the previous
    # tile (zeros for tile 0).  Built with reshape + tiny slice + transpose --
    # no gather, no index arrays -- so x itself is read from HBM once.
    if n_t == 1:
        halo = jnp.zeros((batch, 1, c_in_p, padding), cdt)
    else:
        assert t_tile >= padding, "time_tile must be >= the causal padding"
        xr = x_c.reshape(batch, c_in_p, n_t, t_tile)
        tails = jnp.transpose(xr[:, :, :-1, t_tile - padding:], (0, 2, 1, 3))
        halo = jnp.concatenate(
            [jnp.zeros((batch, 1, c_in_p, padding), cdt), tails], axis=1)
    h_spec = pl.BlockSpec((None, 1, c_in_p, padding), lambda b, t: (b, t, 0, 0))

    win_scratch = pltpu.VMEM((c_in_p, lead + t_tile), cdt)

    if fold_taps:
        # (O, I, K) -> (O, K*I), k-major: slab row block k <-> weight cols
        # [k*C_in_p, (k+1)*C_in_p).
        w2 = jnp.transpose(w_c, (0, 2, 1)).reshape(c_out, kernel_size * c_in_p)
        w_spec = pl.BlockSpec((c_out, kernel_size * c_in_p), lambda b, t: (0, 0))
        scratch = [win_scratch, pltpu.VMEM((kernel_size * c_in_p, t_tile), cdt)]
        kernel = functools.partial(_conv_fold_kernel, kernel_size=kernel_size,
                                   dilation=dilation, padding=padding,
                                   lead=lead, residual=residual, c_out=c_out)
    else:
        w2 = jnp.transpose(w_c, (2, 0, 1))         # (K, C_out, C_in_p)
        w_spec = pl.BlockSpec((kernel_size, c_out, c_in_p),
                              lambda b, t: (0, 0, 0))
        scratch = [win_scratch]
        kernel = functools.partial(_conv_taps_kernel, kernel_size=kernel_size,
                                   dilation=dilation, padding=padding,
                                   lead=lead, residual=residual, c_out=c_out)

    return pl.pallas_call(
        kernel, out_shape=out_shape,
        grid_spec=pltpu.PrefetchScalarGridSpec(
            num_scalar_prefetch=0, grid=grid,
            in_specs=[w_spec, x_spec, h_spec], out_specs=o_spec,
            scratch_shapes=scratch),
        compiler_params=compiler_params)(w2, x_c, halo)


# ---------------------------------------------------------------------------
# Reference + tests
# ---------------------------------------------------------------------------

def _reference(x, weight, *, kernel_size, dilation):
    """Pure-JAX reference mirroring the PyTorch forward exactly."""
    padding = dilation * (kernel_size - 1)
    x_pad = jnp.pad(x, ((0, 0), (0, 0), (padding, 0)))
    out = jax.lax.conv_general_dilated(
        x_pad, weight, window_strides=(1,), padding="VALID",
        rhs_dilation=(dilation,), dimension_numbers=("NCH", "OIH", "NCH"))
    if out.shape[1] == x.shape[1]:
        out = x + out
    return jnp.where(out >= 0, out, 0.2 * out)


if __name__ == "__main__":
    key = jax.random.PRNGKey(0)

    def make(bi, ci, co, ks, T, k):
        kx, kw = jax.random.split(k)
        xx = jax.random.normal(kx, (bi, ci, T), dtype=jnp.float32)
        ww = jax.random.normal(kw, (co, ci, ks), dtype=jnp.float32) * 0.1
        return xx, ww

    k1, k2, k3, k4 = jax.random.split(key, 4)

    # 1) Residual path (C_out == C_in), tiny T -> single time tile.
    x, w = make(2, 4, 4, 3, 16, k1)
    out = jax.block_until_ready(causal_conv(x, w, kernel_size=3, dilation=2))
    ref = _reference(x, w, kernel_size=3, dilation=2)
    assert out.shape == ref.shape
    assert jnp.allclose(out, ref, atol=1e-5, rtol=1e-5)

    # 2) Non-residual path, channel count already sublane-aligned (no pad).
    x2, w2_ = make(2, 8, 4, 3, 16, k2)
    out2 = jax.block_until_ready(causal_conv(x2, w2_, kernel_size=3, dilation=2))
    ref2 = _reference(x2, w2_, kernel_size=3, dilation=2)
    assert jnp.allclose(out2, ref2, atol=1e-5, rtol=1e-5)

    # 3) Multi-tile (batch x time) grid exercising the halo, folded-tap path.
    x3, w3 = make(2, 4, 4, 3, 256, k3)
    out3 = jax.block_until_ready(
        causal_conv(x3, w3, kernel_size=3, dilation=2, time_tile=128))
    ref3 = _reference(x3, w3, kernel_size=3, dilation=2)
    assert jnp.allclose(out3, ref3, atol=1e-5, rtol=1e-5)

    # 3b) Same problem through the slab-free per-tap path (forced).
    out3b = jax.block_until_ready(
        causal_conv(x3, w3, kernel_size=3, dilation=2, time_tile=128,
                    fold_taps=False))
    assert jnp.allclose(out3b, ref3, atol=1e-5, rtol=1e-5)

    # 4) kernel_size == 1 (padding == 0) pointwise path.
    x4, w4 = make(2, 4, 4, 1, 16, k4)
    out4 = jax.block_until_ready(causal_conv(x4, w4, kernel_size=1, dilation=1))
    ref4 = _reference(x4, w4, kernel_size=1, dilation=1)
    assert jnp.allclose(out4, ref4, atol=1e-5, rtol=1e-5)

    # 5) bf16 operand fast path (f32 accumulation) -- looser tolerance.
    out5 = jax.block_until_ready(
        causal_conv(x, w, kernel_size=3, dilation=2, compute_dtype=jnp.bfloat16))
    assert jnp.allclose(out5, ref, atol=0.1, rtol=0.1)

    print("KERNEL_OK")
</pallas_src>

<mosaic_0001>
module attributes {stable_mosaic.version = 11 : i64} {
  func.func @_conv_fold_kernel(%arg0: i32, %arg1: i32, %arg2: memref<4x24xf32, #tpu.memory_space<vmem>>, %arg3: memref<1x8x16xf32, #tpu.memory_space<vmem>>, %arg4: memref<1x1x8x4xf32, #tpu.memory_space<vmem>>, %arg5: memref<1x4x16xf32, #tpu.memory_space<vmem>>, %arg6: memref<8x144xf32, #tpu.memory_space<vmem>>, %arg7: memref<24x16xf32, #tpu.memory_space<vmem>>) attributes {dimension_semantics = [#tpu.dimension_semantics<parallel>, #tpu.dimension_semantics<parallel>], iteration_bounds = array<i64: 2, 1>, scalar_prefetch = 0 : i64, scratch_operands = 2 : i64, tpu.core_type = #tpu.core_type<tc>, window_params = [{pipeline_mode = #tpu.pipeline_mode<synchronous>, transform_indices = @transform_0, window_bounds = array<i64: 4, 24>}, {transform_indices = @transform_1, window_bounds = array<i64: 1, 8, 16>}, {transform_indices = @transform_2, window_bounds = array<i64: 1, 1, 8, 4>}, {transform_indices = @transform_3, window_bounds = array<i64: 1, 4, 16>}]} {
    %c0 = arith.constant 0 : index
    %c0_0 = arith.constant 0 : index
    %c0_1 = arith.constant 0 : index
    %0 = vector.load %arg3[%c0, %c0_0, %c0_1] : memref<1x8x16xf32, #tpu.memory_space<vmem>>, vector<1x8x16xf32>
    %1 = vector.shape_cast %0 : vector<1x8x16xf32> to vector<8x16xf32>
    %c0_2 = arith.constant 0 : index
    %c128 = arith.constant 128 : index
    %2 = vector.load %arg6[%c0_2, %c128] : memref<8x144xf32, #tpu.memory_space<vmem>>, vector<8x16xf32>
    tpu.vector_store %arg6[%c0_2, %c128], %1 {strides = array<i32>} : memref<8x144xf32, #tpu.memory_space<vmem>>, vector<8x16xf32>,
    %c0_3 = arith.constant 0 : index
    %c0_4 = arith.constant 0 : index
    %c0_5 = arith.constant 0 : index
    %c0_6 = arith.constant 0 : index
    %3 = vector.load %arg4[%c0_3, %c0_4, %c0_5, %c0_6] : memref<1x1x8x4xf32, #tpu.memory_space<vmem>>, vector<1x1x8x4xf32>
    %4 = vector.shape_cast %3 : vector<1x1x8x4xf32> to vector<8x4xf32>
    %c0_7 = arith.constant 0 : index
    %c124 = arith.constant 124 : index
    %5 = vector.load %arg6[%c0_7, %c124] : memref<8x144xf32, #tpu.memory_space<vmem>>, vector<8x4xf32>
    tpu.vector_store %arg6[%c0_7, %c124], %4 {strides = array<i32>} : memref<8x144xf32, #tpu.memory_space<vmem>>, vector<8x4xf32>,
    %c0_8 = arith.constant 0 : index
    %c124_9 = arith.constant 124 : index
    %6 = vector.load %arg6[%c0_8, %c124_9] : memref<8x144xf32, #tpu.memory_space<vmem>>, vector<8x16xf32>
    %c0_10 = arith.constant 0 : index
    %c0_11 = arith.constant 0 : index
    %7 = vector.load %arg7[%c0_10, %c0_11] : memref<24x16xf32, #tpu.memory_space<vmem>>, vector<8x16xf32>
    tpu.vector_store %arg7[%c0_10, %c0_11], %6 {strides = array<i32>} : memref<24x16xf32, #tpu.memory_space<vmem>>, vector<8x16xf32>,
    %c0_12 = arith.constant 0 : index
    %c126 = arith.constant 126 : index
    %8 = vector.load %arg6[%c0_12, %c126] : memref<8x144xf32, #tpu.memory_space<vmem>>, vector<8x16xf32>
    %c8 = arith.constant 8 : index
    %c0_13 = arith.constant 0 : index
    %9 = vector.load %arg7[%c8, %c0_13] : memref<24x16xf32, #tpu.memory_space<vmem>>, vector<8x16xf32>
    tpu.vector_store %arg7[%c8, %c0_13], %8 {strides = array<i32>} : memref<24x16xf32, #tpu.memory_space<vmem>>, vector<8x16xf32>,
    %c0_14 = arith.constant 0 : index
    %c128_15 = arith.constant 128 : index
    %10 = vector.load %arg6[%c0_14, %c128_15] : memref<8x144xf32, #tpu.memory_space<vmem>>, vector<8x16xf32>
    %c16 = arith.constant 16 : index
    %c0_16 = arith.constant 0 : index
    %11 = vector.load %arg7[%c16, %c0_16] : memref<24x16xf32, #tpu.memory_space<vmem>>, vector<8x16xf32>
    tpu.vector_store %arg7[%c16, %c0_16], %10 {strides = array<i32>} : memref<24x16xf32, #tpu.memory_space<vmem>>, vector<8x16xf32>,
    %c0_17 = arith.constant 0 : index
    %c0_18 = arith.constant 0 : index
    %12 = vector.load %arg2[%c0_17, %c0_18] : memref<4x24xf32, #tpu.memory_space<vmem>>, vector<4x24xf32>
    %c0_19 = arith.constant 0 : index
    %c0_20 = arith.constant 0 : index
    %13 = vector.load %arg7[%c0_19, %c0_20] : memref<24x16xf32, #tpu.memory_space<vmem>>, vector<24x16xf32>
    %cst = arith.constant dense<0.000000e+00> : vector<4x16xf32>
    %14 = tpu.matmul %12, %13, %cst {dimension_numbers = #tpu.dot_dimension_numbers<[1], [0], [0], [1], [0, 0, 1, 1], [], []>} : vector<4x24xf32>, vector<24x16xf32>, vector<4x16xf32> -> vector<4x16xf32>
    %15 = vector.extract_strided_slice %1 {offsets = [0, 0], sizes = [4, 16], strides = [1, 1]} : vector<8x16xf32> to vector<4x16xf32>
    %16 = arith.addf %14, %15 : vector<4x16xf32>
    %cst_21 = arith.constant 0.000000e+00 : f32
    %17 = vector.broadcast %cst_21 : f32 to vector<4x16xf32>
    %18 = arith.cmpf oge, %16, %17 : vector<4x16xf32>
    %cst_22 = arith.constant 2.000000e-01 : f32
    %19 = vector.broadcast %cst_22 : f32 to vector<4x16xf32>
    %20 = arith.mulf %19, %16 : vector<4x16xf32>
    %21 = arith.select %18, %16, %20 : vector<4x16xi1>, vector<4x16xf32>
    %c0_23 = arith.constant 0 : index
    %c0_24 = arith.constant 0 : index
    %c0_25 = arith.constant 0 : index
    %22 = vector.load %arg5[%c0_23, %c0_24, %c0_25] : memref<1x4x16xf32, #tpu.memory_space<vmem>>, vector<1x4x16xf32>
    %23 = vector.shape_cast %22 : vector<1x4x16xf32> to vector<4x16xf32>
    %24 = vector.shape_cast %21 : vector<4x16xf32> to vector<1x4x16xf32>
    tpu.vector_store %arg5[%c0_23, %c0_24, %c0_25], %24 {strides = array<i32>} : memref<1x4x16xf32, #tpu.memory_space<vmem>>, vector<1x4x16xf32>,
    return
  }
  func.func @transform_0(%arg0: i32, %arg1: i32) -> (i32, i32) {
    %c0_i32 = arith.constant 0 : i32
    %c0_i32_0 = arith.constant 0 : i32
    %c0_i32_1 = arith.constant 0 : i32
    return %c0_i32, %c0_i32_0 : i32, i32
  }
  func.func @transform_1(%arg0: i32, %arg1: i32) -> (i32, i32, i32) {
    %c0_i32 = arith.constant 0 : i32
    %c0_i32_0 = arith.constant 0 : i32
    return %arg0, %c0_i32, %arg1 : i32, i32, i32
  }
  func.func @transform_2(%arg0: i32, %arg1: i32) -> (i32, i32, i32, i32) {
    %c0_i32 = arith.constant 0 : i32
    %c0_i32_0 = arith.constant 0 : i32
    %c0_i32_1 = arith.constant 0 : i32
    return %arg0, %arg1, %c0_i32, %c0_i32_0 : i32, i32, i32, i32
  }
  func.func @transform_3(%arg0: i32, %arg1: i32) -> (i32, i32, i32) {
    %c0_i32 = arith.constant 0 : i32
    %c0_i32_0 = arith.constant 0 : i32
    return %arg0, %c0_i32, %arg1 : i32, i32, i32
  }
}

</mosaic_0001>

<llo_original>
// kernel: tpu_custom_call.1
$region0: #{tpu_custom_call.1}
  #allocation0 [shape = 'u32[]', space=smem, size = 0x4, offset = 0x4, fixed_abs, tag = 'smem constant byte address 0x4 - core index']
  #allocation1 [shape = 'u32[144,128]{1,0:T(1,128)}', space=vmem, size = 0x12000, scoped, tag = 'internal scratch']
  #allocation2 [shape = 'f32[8,144]{1,0:T(8,128)}', space=vmem, size = 0x2000, scoped, tag = 'scratch operand']
  #allocation3 [shape = 'f32[24,16]{1,0:T(8,128)}', space=vmem, size = 0x3000, scoped, tag = 'scratch operand']
  %s0 = inlined_call_operand.vmem [shape: f32[4,24], index: 0, kind: input, shape index: {}]
  %s1 = inlined_call_operand.vmem [shape: f32[2,8,16], index: 1, kind: input, shape index: {}]
  %s2 = inlined_call_operand.vmem [shape: f32[2,1,8,4], index: 2, kind: input, shape index: {}]
  %s3 = inlined_call_operand.hbm [shape: f32[2,4,16], index: 3, kind: output, shape index: {}]
  %s4 = sld [smem:[#allocation0]]
  $region45: #{tpu_custom_call.1} parent=0
    _
  %s6 = ssub.s32 1, %s4
  %s7 = scalar_select 0, %s6, %s4
  $region1: #{tpu_custom_call.1} parent=0
    #allocation4 [shape = 'u8[4096]{0}', space=vmem, size = 0x1000, scoped, tag = 'output window, operand 0']
    #allocation5 [shape = 's32[2]{0}', space=sflag, size = 0x8, scoped, tag = 'scoped memory for tpu_custom_call.1']
    %8 = vsyncpa [#allocation5], 0
    %s9 = scalar_lea.sflag [#allocation5], 1
    %10 = vsyncpa %s9, 0
    loop: start=0, step=1, limit=4
    $region2: #{tpu_custom_call.1} parent=1 // loop_pre_header
      _
    $region3: #{tpu_custom_call.1} parent=1 // loop_header
      %s12 = sphi 0, %s16
      %p13 = scmp.ge.s32.totalorder %s12, 4
      %s19 = sphi 0, %s31
      %s20 = sphi 0, %s27
      %s21 = sphi 0, %s19
      %s22 = sphi 0, %s20
      %s23 = sphi 0, %s21
      %s24 = sphi 0, %s22
      %s32 = sphi 0, %s32
      %s34 = sphi 0, %s32
      %s35 = sphi 0, %s34
      %s49 = sphi 0, %s35
      %s57 = sphi 0, %s59
      %s60 = sphi 0, %s57
      %s61 = sphi 0, %s60
      %s77 = sphi 0, %s61
      %s85 = sphi 0, %s87
      %s88 = sphi 0, %s85
      %s89 = sphi 0, %s88
      %s105 = sphi 0, %s89
      %s113 = sphi 0, %s115
      %s116 = sphi 0, %s113
      %s117 = sphi 0, %s116
      %s133 = sphi 0, %s117
    $region4: #{tpu_custom_call.1} parent=1 // loop_header_branch
      %15 = sbr.rel (%p13) target = $region8
    $region5: #{tpu_custom_call.1} parent=1 // loop_body
      %s17 = ssub.s32 %s12, 1
      %s18 = ssub.s32 %s12, 2
      %s25 = sadd.s32 1, %s20
      %p26 = scmp.ge.s32.totalorder %s25, 1
      %s27 = scalar_select %p26, 0, %s25
      %s28 = sadd.s32 1, %s19
      %s29 = scalar_select %p26, %s28, %s19
      %p30 = scmp.ge.s32.totalorder %s29, 2
      %s31 = scalar_select %p30, 0, %s29
      %s33 = sadd.s32 %s32, 1
      %p36 = scmp.eq.s32.totalorder %s12, 1
      %p37 = scmp.ne.s32.totalorder %s32, %s34
      %p38 = scmp.eq.s32.totalorder %s12, 0
      %p39 = por %p37, %p38
      %p40 = scmp.ne.s32.totalorder %s32, %s34
      %p41 = scmp.eq.s32.totalorder %s17, 1
      %p42 = por %p40, %p41
      %p43 = scmp.ne.s32.totalorder %s34, %s35
      %p44 = scmp.eq.s32.totalorder %s17, 0
      %p45 = por %p43, %p44
      %p46 = scmp.ne.s32.totalorder %s34, %s35
      %p47 = scmp.eq.s32.totalorder %s18, 1
      %p48 = por %p46, %p47
      %p50 = scmp.ne.s32.totalorder %s35, %s49
      %p51 = scmp.eq.s32.totalorder %s18, 0
      %p52 = por %p50, %p51
      %s53 = ssub.s32 %s19, %s31
      %s54 = ssub.s32 %s20, %s27
      %s55 = sor.u32 %s53, %s54
      %p56 = scmp.eq.s32.totalorder %s55, 0
      %s58 = sadd.s32 %s57, 1
      %s59 = scalar_select %p56, %s57, %s58
      %p62 = pneg %p56
      %p63 = scmp.eq.s32.totalorder %s12, 1
      %p64 = por %p62, %p63
      %p65 = scmp.ne.s32.totalorder %s57, %s60
      %p66 = scmp.eq.s32.totalorder %s12, 0
      %p67 = por %p65, %p66
      %p68 = scmp.ne.s32.totalorder %s57, %s60
      %p69 = scmp.eq.s32.totalorder %s17, 1
      %p70 = por %p68, %p69
      %p71 = scmp.ne.s32.totalorder %s60, %s61
      %p72 = scmp.eq.s32.totalorder %s17, 0
      %p73 = por %p71, %p72
      %p74 = scmp.ne.s32.totalorder %s60, %s61
      %p75 = scmp.eq.s32.totalorder %s18, 1
      %p76 = por %p74, %p75
      %p78 = scmp.ne.s32.totalorder %s61, %s77
      %p79 = scmp.eq.s32.totalorder %s18, 0
      %p80 = por %p78, %p79
      %s81 = ssub.s32 %s19, %s31
      %s82 = ssub.s32 %s20, %s27
      %s83 = sor.u32 %s81, %s82
      %p84 = scmp.eq.s32.totalorder %s83, 0
      %s86 = sadd.s32 %s85, 1
      %s87 = scalar_select %p84, %s85, %s86
      %p90 = pneg %p84
      %p91 = scmp.eq.s32.totalorder %s12, 1
      %p92 = por %p90, %p91
      %p93 = scmp.ne.s32.totalorder %s85, %s88
      %p94 = scmp.eq.s32.totalorder %s12, 0
      %p95 = por %p93, %p94
      %p96 = scmp.ne.s32.totalorder %s85, %s88
      %p97 = scmp.eq.s32.totalorder %s17, 1
      %p98 = por %p96, %p97
      %p99 = scmp.ne.s32.totalorder %s88, %s89
      %p100 = scmp.eq.s32.totalorder %s17, 0
      %p101 = por %p99, %p100
      %p102 = scmp.ne.s32.totalorder %s88, %s89
      %p103 = scmp.eq.s32.totalorder %s18, 1
      %p104 = por %p102, %p103
      %p106 = scmp.ne.s32.totalorder %s89, %s105
      %p107 = scmp.eq.s32.totalorder %s18, 0
      %p108 = por %p106, %p107
      %s109 = ssub.s32 %s19, %s31
      %s110 = ssub.s32 %s20, %s27
      %s111 = sor.u32 %s109, %s110
      %p112 = scmp.eq.s32.totalorder %s111, 0
      %s114 = sadd.s32 %s113, 1
      %s115 = scalar_select %p112, %s113, %s114
      %p118 = pneg %p112
      %p119 = scmp.eq.s32.totalorder %s12, 1
      %p120 = por %p118, %p119
      %p121 = scmp.ne.s32.totalorder %s113, %s116
      %p122 = scmp.eq.s32.totalorder %s12, 0
      %p123 = por %p121, %p122
      %p124 = scmp.ne.s32.totalorder %s113, %s116
      %p125 = scmp.eq.s32.totalorder %s17, 1
      %p126 = por %p124, %p125
      %p127 = scmp.ne.s32.totalorder %s116, %s117
      %p128 = scmp.eq.s32.totalorder %s17, 0
      %p129 = por %p127, %p128
      %p130 = scmp.ne.s32.totalorder %s116, %s117
      %p131 = scmp.eq.s32.totalorder %s18, 1
      %p132 = por %p130, %p131
      %p134 = scmp.ne.s32.totalorder %s117, %s133
      %p135 = scmp.eq.s32.totalorder %s18, 0
      %p136 = por %p134, %p135
      %p137 = scmp.le.s32.totalorder 1, %s12
      %p138 = scmp.lt.s32.totalorder %s12, 3
      %p139 = pnand %p137, %p138
      %p140 = pneg %p139
      // Predicated region
      $region9: #{tpu_custom_call.1} parent=5 // pred_check
        _
      $region10: #{tpu_custom_call.1} parent=5 // pred_check_branch
        %142 = sbr.rel (%p139) target = $region12
      $region11: #{tpu_custom_call.1} parent=5 // pred_region
        %s143 = ssub.s32 %s12, 1
        // Predicated region
        $region13: #{tpu_custom_call.1} parent=11 // pred_check
          %p144 = pneg %p45
        $region14: #{tpu_custom_call.1} parent=11 // pred_check_branch
          %146 = sbr.rel (%p144) target = $region16
        $region15: #{tpu_custom_call.1} parent=11 // pred_region
          _
        $region16: #{tpu_custom_call.1} parent=11 // pred_fallthru
          _
      $region12: #{tpu_custom_call.1} parent=5 // pred_fallthru
        _
      %p147 = scmp.lt.s32.totalorder %s12, 2
      // Predicated region
      $region17: #{tpu_custom_call.1} parent=5 // pred_check
        %p148 = pneg %p147
      $region18: #{tpu_custom_call.1} parent=5 // pred_check_branch
        %150 = sbr.rel (%p148) target = $region20
      $region19: #{tpu_custom_call.1} parent=5 // pred_region
        // Predicated region
        $region21: #{tpu_custom_call.1} parent=19 // pred_check
          %p151 = pneg %p67
        $region22: #{tpu_custom_call.1} parent=19 // pred_check_branch
          %153 = sbr.rel (%p151) target = $region24
        $region23: #{tpu_custom_call.1} parent=19 // pred_region
          %p154 = scmp.lt.s32.totalorder %s19, 1
          %s155 = scalar_select %p154, %s19, 1
          %p156 = scmp.lt.s32.totalorder %s20, 0
          %s157 = scalar_select %p156, %s20, 0
          %s158 = sadd.s32 %s157, %s155
          %s159 = smul.addr %s158, 8
          %s160 = scalar_lea.vmem %s1, %s159
        $region24: #{tpu_custom_call.1} parent=19 // pred_fallthru
          _
        // Predicated region
        $region25: #{tpu_custom_call.1} parent=19 // pred_check
          %p161 = pneg %p95
        $region26: #{tpu_custom_call.1} parent=19 // pred_check_branch
          %163 = sbr.rel (%p161) target = $region28
        $region27: #{tpu_custom_call.1} parent=19 // pred_region
          %p164 = scmp.lt.s32.totalorder %s19, 1
          %s165 = scalar_select %p164, %s19, 1
          %p166 = scmp.lt.s32.totalorder %s20, 0
          %s167 = scalar_select %p166, %s20, 0
          %s168 = sadd.s32 %s167, %s165
          %s169 = smul.addr %s168, 8
          %s170 = scalar_lea.vmem %s2, %s169
        $region28: #{tpu_custom_call.1} parent=19 // pred_fallthru
          _
      $region20: #{tpu_custom_call.1} parent=5 // pred_fallthru
        _
      %p171 = scmp.le.s32.totalorder 1, %s12
      %p172 = scmp.lt.s32.totalorder %s12, 3
      %p173 = pnand %p171, %p172
      %p174 = pneg %p173
      // Predicated region
      $region29: #{tpu_custom_call.1} parent=5 // pred_check
        _
      $region30: #{tpu_custom_call.1} parent=5 // pred_check_branch
        %176 = sbr.rel (%p173) target = $region32
      $region31: #{tpu_custom_call.1} parent=5 // pred_region
        %s177 = ssub.s32 %s12, 1
        %p178 = pneg %p45
        %p179 = pneg %p42
        %p180 = scmp.lt.s32.totalorder %s21, 1
        %s181 = scalar_select %p180, %s21, 1
        %p182 = scmp.lt.s32.totalorder %s22, 0
        %s183 = scalar_select %p182, %s22, 0
        %s184 = sadd.s32 %s183, %s181
        %s185 = smul.addr %s184, 8
        %s186 = scalar_lea.vmem %s1, %s185
        %p187 = pneg %p73
        %p188 = pneg %p70
        %p189 = scmp.lt.s32.totalorder %s21, 1
        %s190 = scalar_select %p189, %s21, 1
        %p191 = scmp.lt.s32.totalorder %s22, 0
        %s192 = scalar_select %p191, %s22, 0
        %s193 = sadd.s32 %s192, %s190
        %s194 = smul.addr %s193, 8
        %s195 = scalar_lea.vmem %s2, %s194
        %p196 = pneg %p101
        %p197 = pneg %p98
        %p198 = pneg %p129
        %p199 = pneg %p126
        %s200 = sand.u32 %s116, 1
        %s201 = scalar_lea.sflag [#allocation5], %s200
        %s202 = sand.u32 %s116, 1
        %s203 = smul.addr %s202, 4
        %s204 = scalar_lea.vmem [#allocation4], %s203
        %p205 = scmp.lt.s32.totalorder %s21, 1
        %s206 = scalar_select %p205, %s21, 1
        %p207 = scmp.lt.s32.totalorder %s22, 0
        %s208 = scalar_select %p207, %s22, 0
        %s209 = sadd.s32 %s208, %s206
        %s210 = smul.addr %s209, 8
        %s211 = scalar_lea.vmem %s1, %s210
        %p212 = scmp.lt.s32.totalorder %s21, 1
        %s213 = scalar_select %p212, %s21, 1
        %p214 = scmp.lt.s32.totalorder %s22, 0
        %s215 = scalar_select %p214, %s22, 0
        %s216 = sadd.s32 %s215, %s213
        %s217 = smul.addr %s216, 8
        %s218 = scalar_lea.vmem %s2, %s217
        %v219 = vld [vmem:[%s211] sm:$0xff]
        %vm220 = vcmask 130048
        %221 = vst.msk [vmem:[#allocation2 + $0x8] sm:$0xff] %vm220, %v219
        %v222 = vld [vmem:[%s218] sm:$0xff]
        %224 = vrot.lane.b32.xlu0 %v222, 124
        %v225 = vpop.permute.xlu0 %224
        %vm227 = vcmask 1048544
        %228 = vst.msk [vmem:[#allocation2] sm:$0xff] %vm227, %v225
        %v229 = vld [vmem:[#allocation2] sm:$0xff]
        %v230 = vld [vmem:[#allocation2 + $0x8] sm:$0xff]
        %233 = vrot.lane.b32.xlu0 %v229, 4
        %v234 = vpop.permute.xlu0 %233
        %235 = vrot.lane.b32.xlu0 %v230, 4
        %v236 = vpop.permute.xlu0 %235
        %vm237 = vcmask 31744
        %v238 = vsel %vm237, %v234, %v236
        %240 = vst.msk [vmem:[#allocation3] sm:$0xff] %vm220, %v238
        %v241 = vld [vmem:[#allocation2] sm:$0xff]
        %v242 = vld [vmem:[#allocation2 + $0x8] sm:$0xff]
        %245 = vrot.lane.b32.xlu0 %v241, 2
        %v246 = vpop.permute.xlu0 %245
        %247 = vrot.lane.b32.xlu0 %v242, 2
        %v248 = vpop.permute.xlu0 %247
        %vm249 = vcmask 15360
        %v250 = vsel %vm249, %v246, %v248
        %252 = vst.msk [vmem:[#allocation3 + $0x8] sm:$0xff] %vm220, %v250
        %v253 = vld [vmem:[#allocation2 + $0x8] sm:$0xff]
        %254 = vst.msk [vmem:[#allocation3 + $0x10] sm:$0xff] %vm220, %v253
        %v255 = vld [vmem:[%s0] sm:$0xf]
        %v256 = vld [vmem:[#allocation3] sm:$0xff]
        %v257 = vld [vmem:[#allocation3 + $0x8] sm:$0xff]
        %v258 = vld [vmem:[#allocation3 + $0x10] sm:$0xff]
        %vm259 = vcmask 195584
        %v261 = vsel %vm259, %v255, 0
        %263 = vmatprep.subr.mxu0 0.0
        %264 = vmatpush1.msra.mxu0 %v256
        %265 = vmatprep.subr.mxu0 0.0
        %266 = vmatpush1.msra.mxu0 %v257
        %267 = vmatprep.subr.mxu0 0.0
        %268 = vmatpush1.msra.mxu0 %v258
        %269 = vmatprep.subr.mxu0 0.0
        %270 = vmatpush1.msra.mxu0 0.0
        %271 = vmatprep.subr.mxu0 0.0
        %272 = vmatpush1.msra.mxu0 0.0
        %273 = vmatprep.subr.mxu0 0.0
        %274 = vmatpush1.msra.mxu0 0.0
        %275 = vmatprep.subr.mxu0 0.0
        %276 = vmatpush1.msra.mxu0 0.0
        %277 = vmatprep.subr.mxu0 0.0
        %278 = vmatpush1.msra.mxu0 0.0
        %279 = vmatprep.subr.mxu0 0.0
        %280 = vmatpush1.msra.mxu0 0.0
        %281 = vmatprep.subr.mxu0 0.0
        %282 = vmatpush1.msra.mxu0 0.0
        %283 = vmatprep.subr.mxu0 0.0
        %284 = vmatpush1.msra.mxu0 0.0
        %285 = vmatprep.subr.mxu0 0.0
        %286 = vmatpush1.msra.mxu0 0.0
        %287 = vmatprep.subr.mxu0 0.0
        %288 = vmatpush1.msra.mxu0 0.0
        %289 = vmatprep.subr.mxu0 0.0
        %290 = vmatpush1.msra.mxu0 0.0
        %291 = vmatprep.subr.mxu0 0.0
        %292 = vmatpush1.msra.mxu0 0.0
        %293 = vmatprep.subr.mxu0 0.0
        %294 = vmatpush1.msra.mxu0 0.0
        %295 = vmatprep.subr.mxu0 0.0
        %296 = vmatpush1.msra.mxu0 0.0
        %297 = vmatprep.subr.mxu0 0.0
        %298 = vmatpush1.msra.mxu0 0.0
        %299 = vmatprep.subr.mxu0 0.0
        %300 = vmatpush1.msra.mxu0 0.0
        %301 = vmatprep.subr.mxu0 0.0
        %302 = vmatpush1.msra.mxu0 0.0
        %303 = vmatprep.subr.mxu0 0.0
        %304 = vmatpush1.msra.mxu0 0.0
        %305 = vmatprep.subr.mxu0 0.0
        %306 = vmatpush1.msra.mxu0 0.0
        %307 = vmatprep.subr.mxu0 0.0
        %308 = vmatpush1.msra.mxu0 0.0
        %309 = vmatprep.subr.mxu0 0.0
        %310 = vmatpush1.msra.mxu0 0.0
        %311 = vmatprep.subr.mxu0 0.0
        %312 = vmatpush1.msra.mxu0 0.0
        %313 = vmatprep.subr.mxu0 0.0
        %314 = vmatpush1.msra.mxu0 0.0
        %315 = vmatprep.subr.mxu0 0.0
        %316 = vmatpush1.msra.mxu0 0.0
        %317 = vmatprep.subr.mxu0 0.0
        %318 = vmatpush1.msra.mxu0 0.0
        %319 = vmatprep.subr.mxu0 0.0
        %320 = vmatpush1.msra.mxu0 0.0
        %321 = vmatprep.subr.mxu0 0.0
        %322 = vmatpush1.msra.mxu0 0.0
        %323 = vmatprep.subr.mxu0 0.0
        %324 = vmatpush1.msra.mxu0 0.0
        %325 = vmatprep.subr.mxu0 0.0
        %326 = vmatpush1.msra.mxu0 0.0
        %327 = vmatprep.mubr.f32.mxu0 0.0
        %328 = vmatmul.mubr.f32.gmra.mrb[0].mxu0 %v261
        %v329 = vpop.f32.mrb[0].mxu0
        %v330 = vadd.f32 %v219, %v329
        %v331 = vpop.f32.mrb[0].mxu0
        %332 = vdwg.mxu0
        %vm333 = vcmp.ge.f32.partialorder %v330, 0.0
        %v334 = vmul.f32 %v330, 0.2
        %v335 = vsel %vm333, %v330, %v334
        %vm336 = vcmask 125952
        %337 = vst.msk [vmem:[%s204] sm:$0xf] %vm336, %v335
        %s338 = sand.u32 %s116, 1
        %s339 = scalar_lea.sflag [#allocation5], %s338
        %s340 = sand.u32 %s116, 1
        %s341 = smul.addr %s340, 4
        %s342 = scalar_lea.vmem [#allocation4], %s341
        // Predicated region
        $region33: #{tpu_custom_call.1} parent=31 // pred_check
          %p343 = pneg %p126
        $region34: #{tpu_custom_call.1} parent=31 // pred_check_branch
          %345 = sbr.rel (%p343) target = $region36
        $region35: #{tpu_custom_call.1} parent=31 // pred_region
          %s347 = ssub.s32 64, 64
          %348 = vsyncadd %s339, %s347
          %s349 = sadd.s32 %s22, %s21
          %s350 = smul.addr %s349, 64
          %s351 = scalar_lea.hbm %s3, %s350
          %s353 = sshll.u32 %s342, 4
          %s354 = int_to_ptr.vmem [resolvable:$true] %s353
          %356 = dma.vmem_to_hbm [thread:$0]  %s354, 64, %s351, %s339
        $region36: #{tpu_custom_call.1} parent=31 // pred_fallthru
          _
      $region32: #{tpu_custom_call.1} parent=5 // pred_fallthru
        _
      %p357 = scmp.le.s32.totalorder 2, %s12
      // Predicated region
      $region37: #{tpu_custom_call.1} parent=5 // pred_check
        %p358 = pneg %p357
      $region38: #{tpu_custom_call.1} parent=5 // pred_check_branch
        %360 = sbr.rel (%p358) target = $region40
      $region39: #{tpu_custom_call.1} parent=5 // pred_region
        %s361 = ssub.s32 %s12, 2
        // Predicated region
        $region41: #{tpu_custom_call.1} parent=39 // pred_check
          %p362 = pneg %p132
        $region42: #{tpu_custom_call.1} parent=39 // pred_check_branch
          %364 = sbr.rel (%p362) target = $region44
        $region43: #{tpu_custom_call.1} parent=39 // pred_region
          %s365 = sand.u32 %s117, 1
          %s366 = scalar_lea.sflag [#allocation5], %s365
          %s367 = sand.u32 %s117, 1
          %s368 = smul.addr %s367, 4
          %s369 = scalar_lea.vmem [#allocation4], %s368
          %370 = dma.done %s366, 64
        $region44: #{tpu_custom_call.1} parent=39 // pred_fallthru
          _
      $region40: #{tpu_custom_call.1} parent=5 // pred_fallthru
        _
    $region6: #{tpu_custom_call.1} parent=1 // loop_footer
      %s16 = sadd.s32 1, %s12
    $region7: #{tpu_custom_call.1} parent=1 // loop_footer_branch
      %11 = sbr.rel target = $region3
    $region8: #{tpu_custom_call.1} parent=1 // loop_exit
      _
    %371 = vsyncpa [#allocation5], 1
    %s372 = scalar_lea.sflag [#allocation5], 1
    %373 = vsyncpa %s372, 1

</llo_original>
